<compile_context>
chip_gen: v7x
topology: tpu7x:2x2x1
jax: 0.10.0
libtpu: 0.0.40
codegen_flags: <defaults>
</compile_context>

<pallas_src>
import jax
import jax.numpy as jnp
import numpy as np
from jax.experimental import pallas as pl
from jax.experimental.pallas import tpu as pltpu


def _round_up(x, m):
    return (x + m - 1) // m * m


def _convt_silu_kernel(w_ref, p_ref, o_ref):
    # (Cout, Kp) @ (Kp, TM) on the MXU; bias is folded into w via the ones-row of p.
    v = jnp.dot(w_ref[0], p_ref[...], preferred_element_type=jnp.float32)
    o_ref[...] = v * jax.nn.sigmoid(v)          # SiLU epilogue (VPU + EUP)


def prepare_convt_weights(weight, bias, groups=2):
    """One-time host-side precompute of per-phase weight slabs.

    weight: (Cin, Cout//groups, 3, 3) PyTorch ConvTranspose2d layout, bias: (Cout,).
    Returns w4: (4, Cout, Kp) with K index = (ic, dh, dw) over the 2x2 input window,
    bias in column K, zero padding up to Kp (multiple of 8).  Valid for
    stride=2, padding=1, kernel=3 (the module's config).
    """
    w = np.asarray(weight, np.float32)
    b = np.asarray(bias, np.float32)
    Cin, Cpg, kH, kW = w.shape
    assert (kH, kW) == (3, 3)
    Cout = Cpg * groups
    Cin_pg = Cin // groups
    K = Cin * 4                      # taps (dh, dw) in {0,1}^2 per input channel
    Kp = _round_up(K + 1, 8)         # +1 ones-row for the bias, pad to sublane mult
    # output parity r, input-tap offset d  ->  kernel index (stride=2, pad=1, k=3):
    #   r=0: only d=0 contributes, via kernel index 1
    #   r=1: d=0 uses kernel index 2, d=1 uses kernel index 0
    tap = {(0, 0): 1, (0, 1): None, (1, 0): 2, (1, 1): 0}
    w4 = np.zeros((4, Cout, Kp), np.float32)
    for rh in (0, 1):
        for rw in (0, 1):
            p = rh * 2 + rw
            for dh in (0, 1):
                kh = tap[(rh, dh)]
                if kh is None:
                    continue
                for dw in (0, 1):
                    kw = tap[(rw, dw)]
                    if kw is None:
                        continue
                    for ic in range(Cin):
                        g = ic // Cin_pg
                        w4[p, g * Cpg:(g + 1) * Cpg, ic * 4 + dh * 2 + dw] = \
                            w[ic, :, kh, kw]
            w4[p, :, K] = b              # bias folded into the matmul
    return jnp.asarray(w4)


def conv_transpose2d_silu(x, w4):
    """x: (N, Cin, H, W) f32; w4: (4, Cout, Kp) from prepare_convt_weights.
    Implements ConvTranspose2d(k=3, stride=2, padding=1, groups) + SiLU."""
    N, Cin, H, W = x.shape
    _, Cout, Kp = w4.shape
    OH, OW = 2 * H - 1, 2 * W - 1
    M = N * H * W

    # ---- shared patch slab P: rows = (ic, dh, dw) over 2x2 window, + ones row ----
    x_pad = jnp.pad(x, ((0, 0), (0, 0), (0, 1), (0, 1)))          # bottom/right pad
    taps = [x_pad[:, :, dh:dh + H, dw:dw + W] for dh in (0, 1) for dw in (0, 1)]
    P = jnp.stack(taps, axis=2)                                   # (N, Cin, 4, H, W)
    P = jnp.transpose(P, (1, 2, 0, 3, 4)).reshape(Cin * 4, M)     # (K, M)
    P = jnp.concatenate([P, jnp.ones((1, M), P.dtype)], axis=0)   # bias row

    MP = _round_up(M, 128)                                        # lane-dense output
    TM = MP if MP <= 512 else 512
    MP = _round_up(MP, TM)
    n_mt = MP // TM
    P = jnp.pad(P, ((0, Kp - (Cin * 4 + 1)), (0, MP - M)))        # (Kp, MP)

    out_flat = pl.pallas_call(
        _convt_silu_kernel,
        out_shape=jax.ShapeDtypeStruct((Cout, 4 * MP), jnp.float32),
        grid=(4, n_mt),
        in_specs=[
            pl.BlockSpec((1, Cout, Kp), lambda p, m: (p, 0, 0)),   # per-phase weights
            pl.BlockSpec((Kp, TM), lambda p, m: (0, m)),           # shared patches
        ],
        out_specs=pl.BlockSpec((Cout, TM), lambda p, m: (0, p * n_mt + m)),
        compiler_params=pltpu.CompilerParams(
            dimension_semantics=("parallel", "parallel")),
    )(w4, P)

    # ---- de-interleave the 4 parity phases back to NCHW (tiny layout plumbing) ----
    out = out_flat.reshape(Cout, 4, MP)[:, :, :M]
    out = out.reshape(Cout, 2, 2, N, H, W)
    out = jnp.transpose(out, (3, 0, 4, 1, 5, 2)).reshape(N, Cout, 2 * H, 2 * W)
    return out[:, :, :OH, :OW]


def _reference(x, weight, bias, *, stride=2, padding=1, groups=2):
    """Pure-XLA reference: transposed conv as dilated conv with flipped kernel."""
    Cin, Cpg, kH, kW = weight.shape
    Cout = Cpg * groups
    Cin_pg = Cin // groups
    w_flip = weight[:, :, ::-1, ::-1]
    w_conv = w_flip.reshape(groups, Cin_pg, Cpg, kH, kW)
    w_conv = jnp.transpose(w_conv, (0, 2, 1, 3, 4)).reshape(Cout, Cin_pg, kH, kW)
    pad = kH - 1 - padding
    y = jax.lax.conv_general_dilated(
        x, w_conv, window_strides=(1, 1),
        padding=[(pad, pad), (pad, pad)],
        lhs_dilation=(stride, stride),
        dimension_numbers=("NCHW", "OIHW", "NCHW"),
        feature_group_count=groups,
        precision=jax.lax.Precision.HIGHEST)
    y = y + bias[None, :, None, None]
    return y * jax.nn.sigmoid(y)


if __name__ == "__main__":
    key = jax.random.PRNGKey(0)
    k_x, k_w, k_b = jax.random.split(key, 3)

    # input matching the module's forward: (1, 4, 8, 8)
    x1 = jax.random.normal(k_x, (1, 4, 8, 8), jnp.float32)

    # ConvTranspose2d(4, 10, 3, stride=2, padding=1, groups=2) parameters:
    # weight (Cin=4, Cout/groups=5, 3, 3), bias (10,)
    fan = 2 * 3 * 3  # in_channels/groups * kH * kW
    bound = 1.0 / (fan ** 0.5)
    weight = jax.random.uniform(k_w, (4, 5, 3, 3), jnp.float32, -bound, bound)
    bias = jax.random.uniform(k_b, (10,), jnp.float32, -bound, bound)

    w4 = prepare_convt_weights(weight, bias, groups=2)   # once, at parameter load
    fwd = jax.jit(conv_transpose2d_silu)
    out = jax.block_until_ready(fwd(x1, w4))
    assert out.shape == (1, 10, 15, 15), out.shape

    # self-check against a pure-XLA reference of the same module
    ref = _reference(x1, weight, bias)
    max_err = float(jnp.max(jnp.abs(out - ref)))
    assert max_err < 1e-3, max_err

    print("KERNEL_OK")
</pallas_src>

<mosaic_0001>
module attributes {stable_mosaic.version = 11 : i64} {
  func.func @_convt_silu_kernel(%arg0: i32, %arg1: i32, %arg2: memref<1x10x24xf32, #tpu.memory_space<vmem>>, %arg3: memref<24x128xf32, #tpu.memory_space<vmem>>, %arg4: memref<10x128xf32, #tpu.memory_space<vmem>>) attributes {dimension_semantics = [#tpu.dimension_semantics<parallel>, #tpu.dimension_semantics<parallel>], iteration_bounds = array<i64: 4, 1>, scalar_prefetch = 0 : i64, scratch_operands = 0 : i64, tpu.core_type = #tpu.core_type<tc>, window_params = [{transform_indices = @transform_0, window_bounds = array<i64: 1, 10, 24>}, {transform_indices = @transform_1, window_bounds = array<i64: 24, 128>}, {transform_indices = @transform_2, window_bounds = array<i64: 10, 128>}]} {
    %c0 = arith.constant 0 : index
    %c0_0 = arith.constant 0 : index
    %c0_1 = arith.constant 0 : index
    %0 = vector.load %arg2[%c0, %c0_0, %c0_1] : memref<1x10x24xf32, #tpu.memory_space<vmem>>, vector<1x10x24xf32>
    %1 = vector.shape_cast %0 : vector<1x10x24xf32> to vector<10x24xf32>
    %c0_2 = arith.constant 0 : index
    %c0_3 = arith.constant 0 : index
    %2 = vector.load %arg3[%c0_2, %c0_3] : memref<24x128xf32, #tpu.memory_space<vmem>>, vector<24x128xf32>
    %cst = arith.constant dense<0.000000e+00> : vector<10x128xf32>
    %3 = tpu.matmul %1, %2, %cst {dimension_numbers = #tpu.dot_dimension_numbers<[1], [0], [0], [1], [0, 0, 1, 1], [], []>} : vector<10x24xf32>, vector<24x128xf32>, vector<10x128xf32> -> vector<10x128xf32>
    %4 = arith.negf %3 : vector<10x128xf32>
    %5 = math.exp %4 : vector<10x128xf32>
    %cst_4 = arith.constant 1.000000e+00 : f32
    %6 = vector.broadcast %cst_4 : f32 to vector<10x128xf32>
    %7 = arith.addf %6, %5 : vector<10x128xf32>
    %8 = arith.divf %6, %7 : vector<10x128xf32>
    %9 = arith.mulf %3, %8 : vector<10x128xf32>
    %c0_5 = arith.constant 0 : index
    %c0_6 = arith.constant 0 : index
    %10 = vector.load %arg4[%c0_5, %c0_6] : memref<10x128xf32, #tpu.memory_space<vmem>>, vector<10x128xf32>
    tpu.vector_store %arg4[%c0_5, %c0_6], %9 {strides = array<i32>} : memref<10x128xf32, #tpu.memory_space<vmem>>, vector<10x128xf32>,
    return
  }
  func.func @transform_0(%arg0: i32, %arg1: i32) -> (i32, i32, i32) {
    %c0_i32 = arith.constant 0 : i32
    %c0_i32_0 = arith.constant 0 : i32
    %c0_i32_1 = arith.constant 0 : i32
    return %arg0, %c0_i32, %c0_i32_0 : i32, i32, i32
  }
  func.func @transform_1(%arg0: i32, %arg1: i32) -> (i32, i32) {
    %c0_i32 = arith.constant 0 : i32
    %c0_i32_0 = arith.constant 0 : i32
    return %c0_i32, %arg1 : i32, i32
  }
  func.func @transform_2(%arg0: i32, %arg1: i32) -> (i32, i32) {
    %c1_i32 = arith.constant 1 : i32
    %0 = arith.muli %arg0, %c1_i32 : i32
    %1 = arith.addi %0, %arg1 : i32
    %c0_i32 = arith.constant 0 : i32
    %c0_i32_0 = arith.constant 0 : i32
    return %c0_i32, %1 : i32, i32
  }
}

</mosaic_0001>

<llo_original>
// kernel: conv_transpose2d_silu.1
$region0: #{conv_transpose2d_silu.1}
  #allocation0 [shape = 'u32[]', space=smem, size = 0x4, offset = 0x4, fixed_abs, tag = 'smem constant byte address 0x4 - core index']
  #allocation1 [shape = 'u32[144,128]{1,0:T(1,128)}', space=vmem, size = 0x12000, scoped, tag = 'internal scratch']
  %s0 = inlined_call_operand.vmem [shape: f32[4,10,24], index: 0, kind: input, shape index: {}]
  %s1 = inlined_call_operand.vmem [shape: f32[24,128], index: 1, kind: input, shape index: {}]
  %s2 = inlined_call_operand.vmem [shape: f32[10,512], index: 2, kind: output, shape index: {}]
  %s3 = sld [smem:[#allocation0]]
  $region75: #{conv_transpose2d_silu.1} parent=0
    _
  %s5 = ssub.s32 1, %s3
  %s6 = scalar_select 0, %s5, %s3
  $region1: #{conv_transpose2d_silu.1} parent=0
    #allocation2 [shape = 'u8[16384]{0}', space=vmem, size = 0x4000, scoped, tag = 'output window, operand 0']
    loop: start=0, step=1, limit=6
    $region2: #{conv_transpose2d_silu.1} parent=1 // loop_pre_header
      _
    $region3: #{conv_transpose2d_silu.1} parent=1 // loop_header
      %s8 = sphi 0, %s12
      %p9 = scmp.ge.s32.totalorder %s8, 6
      %s15 = sphi 0, %s27
      %s16 = sphi 0, %s23
      %s17 = sphi 0, %s15
      %s18 = sphi 0, %s16
      %s19 = sphi 0, %s17
      %s20 = sphi 0, %s18
      %s30 = sphi 0, %s32
      %s33 = sphi 0, %s30
      %s34 = sphi 0, %s33
      %s50 = sphi 0, %s34
      %s56 = sphi 0, %s58
      %s59 = sphi 0, %s56
      %s60 = sphi 0, %s59
      %s76 = sphi 0, %s60
      %s84 = sphi 0, %s86
      %s87 = sphi 0, %s84
      %s88 = sphi 0, %s87
      %s104 = sphi 0, %s88
    $region4: #{conv_transpose2d_silu.1} parent=1 // loop_header_branch
      %11 = sbr.rel (%p9) target = $region8
    $region5: #{conv_transpose2d_silu.1} parent=1 // loop_body
      %s13 = ssub.s32 %s8, 1
      %s14 = ssub.s32 %s8, 2
      %s21 = sadd.s32 1, %s16
      %p22 = scmp.ge.s32.totalorder %s21, 1
      %s23 = scalar_select %p22, 0, %s21
      %s24 = sadd.s32 1, %s15
      %s25 = scalar_select %p22, %s24, %s15
      %p26 = scmp.ge.s32.totalorder %s25, 4
      %s27 = scalar_select %p26, 0, %s25
      %s28 = ssub.s32 %s15, %s27
      %p29 = scmp.eq.s32.totalorder %s28, 0
      %s31 = sadd.s32 %s30, 1
      %s32 = scalar_select %p29, %s30, %s31
      %p35 = pneg %p29
      %p36 = scmp.eq.s32.totalorder %s8, 3
      %p37 = por %p35, %p36
      %p38 = scmp.ne.s32.totalorder %s30, %s33
      %p39 = scmp.eq.s32.totalorder %s8, 0
      %p40 = por %p38, %p39
      %p41 = scmp.ne.s32.totalorder %s30, %s33
      %p42 = scmp.eq.s32.totalorder %s13, 3
      %p43 = por %p41, %p42
      %p44 = scmp.ne.s32.totalorder %s33, %s34
      %p45 = scmp.eq.s32.totalorder %s13, 0
      %p46 = por %p44, %p45
      %p47 = scmp.ne.s32.totalorder %s33, %s34
      %p48 = scmp.eq.s32.totalorder %s14, 3
      %p49 = por %p47, %p48
      %p51 = scmp.ne.s32.totalorder %s34, %s50
      %p52 = scmp.eq.s32.totalorder %s14, 0
      %p53 = por %p51, %p52
      %s54 = ssub.s32 %s16, %s23
      %p55 = scmp.eq.s32.totalorder %s54, 0
      %s57 = sadd.s32 %s56, 1
      %s58 = scalar_select %p55, %s56, %s57
      %p61 = pneg %p55
      %p62 = scmp.eq.s32.totalorder %s8, 3
      %p63 = por %p61, %p62
      %p64 = scmp.ne.s32.totalorder %s56, %s59
      %p65 = scmp.eq.s32.totalorder %s8, 0
      %p66 = por %p64, %p65
      %p67 = scmp.ne.s32.totalorder %s56, %s59
      %p68 = scmp.eq.s32.totalorder %s13, 3
      %p69 = por %p67, %p68
      %p70 = scmp.ne.s32.totalorder %s59, %s60
      %p71 = scmp.eq.s32.totalorder %s13, 0
      %p72 = por %p70, %p71
      %p73 = scmp.ne.s32.totalorder %s59, %s60
      %p74 = scmp.eq.s32.totalorder %s14, 3
      %p75 = por %p73, %p74
      %p77 = scmp.ne.s32.totalorder %s60, %s76
      %p78 = scmp.eq.s32.totalorder %s14, 0
      %p79 = por %p77, %p78
      %s80 = sadd.s32 %s15, %s16
      %s81 = sadd.s32 %s27, %s23
      %s82 = ssub.s32 %s80, %s81
      %p83 = scmp.eq.s32.totalorder %s82, 0
      %s85 = sadd.s32 %s84, 1
      %s86 = scalar_select %p83, %s84, %s85
      %p89 = pneg %p83
      %p90 = scmp.eq.s32.totalorder %s8, 3
      %p91 = por %p89, %p90
      %p92 = scmp.ne.s32.totalorder %s84, %s87
      %p93 = scmp.eq.s32.totalorder %s8, 0
      %p94 = por %p92, %p93
      %p95 = scmp.ne.s32.totalorder %s84, %s87
      %p96 = scmp.eq.s32.totalorder %s13, 3
      %p97 = por %p95, %p96
      %p98 = scmp.ne.s32.totalorder %s87, %s88
      %p99 = scmp.eq.s32.totalorder %s13, 0
      %p100 = por %p98, %p99
      %p101 = scmp.ne.s32.totalorder %s87, %s88
      %p102 = scmp.eq.s32.totalorder %s14, 3
      %p103 = por %p101, %p102
      %p105 = scmp.ne.s32.totalorder %s88, %s104
      %p106 = scmp.eq.s32.totalorder %s14, 0
      %p107 = por %p105, %p106
      %p108 = scmp.le.s32.totalorder 1, %s8
      %p109 = scmp.lt.s32.totalorder %s8, 5
      %p110 = pnand %p108, %p109
      %p111 = pneg %p110
      // Predicated region
      $region9: #{conv_transpose2d_silu.1} parent=5 // pred_check
        _
      $region10: #{conv_transpose2d_silu.1} parent=5 // pred_check_branch
        %113 = sbr.rel (%p110) target = $region12
      $region11: #{conv_transpose2d_silu.1} parent=5 // pred_region
        %s114 = ssub.s32 %s8, 1
        // Predicated region
        $region13: #{conv_transpose2d_silu.1} parent=11 // pred_check
          %p115 = pneg %p72
        $region14: #{conv_transpose2d_silu.1} parent=11 // pred_check_branch
          %117 = sbr.rel (%p115) target = $region16
        $region15: #{conv_transpose2d_silu.1} parent=11 // pred_region
          %p118 = scmp.lt.s32.totalorder %s18, 0
          %s119 = scalar_select %p118, %s18, 0
          %s120 = smul.addr %s119, 8
          %s121 = scalar_lea.vmem %s1, %s120
        $region16: #{conv_transpose2d_silu.1} parent=11 // pred_fallthru
          _
      $region12: #{conv_transpose2d_silu.1} parent=5 // pred_fallthru
        _
      %p122 = scmp.lt.s32.totalorder %s8, 4
      // Predicated region
      $region17: #{conv_transpose2d_silu.1} parent=5 // pred_check
        %p123 = pneg %p122
      $region18: #{conv_transpose2d_silu.1} parent=5 // pred_check_branch
        %125 = sbr.rel (%p123) target = $region20
      $region19: #{conv_transpose2d_silu.1} parent=5 // pred_region
        // Predicated region
        $region21: #{conv_transpose2d_silu.1} parent=19 // pred_check
          %p126 = pneg %p40
        $region22: #{conv_transpose2d_silu.1} parent=19 // pred_check_branch
          %128 = sbr.rel (%p126) target = $region24
        $region23: #{conv_transpose2d_silu.1} parent=19 // pred_region
          %p129 = scmp.lt.s32.totalorder %s15, 3
          %s130 = scalar_select %p129, %s15, 3
          %s131 = smul.addr %s130, 2
          %s132 = smul.addr %s131, 8
          %s133 = scalar_lea.vmem %s0, %s132
        $region24: #{conv_transpose2d_silu.1} parent=19 // pred_fallthru
          _
      $region20: #{conv_transpose2d_silu.1} parent=5 // pred_fallthru
        _
      %p134 = scmp.le.s32.totalorder 1, %s8
      %p135 = scmp.lt.s32.totalorder %s8, 5
      %p136 = pnand %p134, %p135
      %p137 = pneg %p136
      // Predicated region
      $region25: #{conv_transpose2d_silu.1} parent=5 // pred_check
        _
      $region26: #{conv_transpose2d_silu.1} parent=5 // pred_check_branch
        %139 = sbr.rel (%p136) target = $region28
      $region27: #{conv_transpose2d_silu.1} parent=5 // pred_region
        %s140 = ssub.s32 %s8, 1
        %p141 = scmp.lt.s32.totalorder %s17, 3
        %s142 = scalar_select %p141, %s17, 3
        %s143 = smul.addr %s142, 2
        %s144 = smul.addr %s143, 8
        %s145 = scalar_lea.vmem %s0, %s144
        %p146 = pneg %p46
        %p147 = pneg %p43
        %p148 = scmp.lt.s32.totalorder %s18, 0
        %s149 = scalar_select %p148, %s18, 0
        %s150 = smul.addr %s149, 8
        %s151 = scalar_lea.vmem %s1, %s150
        %p152 = pneg %p72
        %p153 = pneg %p69
        %p154 = pneg %p100
        %p155 = pneg %p97
        %s156 = sand.u32 %s87, 1
        %s157 = sand.u32 %s87, 1
        %s158 = smul.addr %s157, 16
        %s159 = scalar_lea.vmem [#allocation2], %s158
        %p160 = scmp.lt.s32.totalorder %s17, 3
        %s161 = scalar_select %p160, %s17, 3
        %s162 = smul.addr %s161, 2
        %s163 = smul.addr %s162, 8
        %s164 = scalar_lea.vmem %s0, %s163
        %p165 = scmp.lt.s32.totalorder %s18, 0
        %s166 = scalar_select %p165, %s18, 0
        %s167 = smul.addr %s166, 8
        %s168 = scalar_lea.vmem %s1, %s167
        %s169 = sadd.s32 %s17, %s18
        %v170 = vld [vmem:[%s164] sm:$0xff]
        %v171 = vld [vmem:[%s164 + $0x8] sm:$0x3]
        %v172 = vld [vmem:[%s168] sm:$0xff]
        %v173 = vld [vmem:[%s168 + $0x8] sm:$0xff]
        %v174 = vld [vmem:[%s168 + $0x10] sm:$0xff]
        %vm175 = vcmask 195584
        %v177 = vsel %vm175, %v170, 0
        %v180 = vsel %vm175, %v171, 0
        %182 = vmatprep.subr.mxu0 0.0
        %183 = vmatpush1.msra.mxu0 %v172
        %184 = vmatprep.subr.mxu0 0.0
        %185 = vmatpush1.msra.mxu0 %v173
        %186 = vmatprep.subr.mxu0 0.0
        %187 = vmatpush1.msra.mxu0 %v174
        %188 = vmatprep.subr.mxu0 0.0
        %189 = vmatpush1.msra.mxu0 0.0
        %190 = vmatprep.subr.mxu0 0.0
        %191 = vmatpush1.msra.mxu0 0.0
        %192 = vmatprep.subr.mxu0 0.0
        %193 = vmatpush1.msra.mxu0 0.0
        %194 = vmatprep.subr.mxu0 0.0
        %195 = vmatpush1.msra.mxu0 0.0
        %196 = vmatprep.subr.mxu0 0.0
        %197 = vmatpush1.msra.mxu0 0.0
        %198 = vmatprep.subr.mxu0 0.0
        %199 = vmatpush1.msra.mxu0 0.0
        %200 = vmatprep.subr.mxu0 0.0
        %201 = vmatpush1.msra.mxu0 0.0
        %202 = vmatprep.subr.mxu0 0.0
        %203 = vmatpush1.msra.mxu0 0.0
        %204 = vmatprep.subr.mxu0 0.0
        %205 = vmatpush1.msra.mxu0 0.0
        %206 = vmatprep.subr.mxu0 0.0
        %207 = vmatpush1.msra.mxu0 0.0
        %208 = vmatprep.subr.mxu0 0.0
        %209 = vmatpush1.msra.mxu0 0.0
        %210 = vmatprep.subr.mxu0 0.0
        %211 = vmatpush1.msra.mxu0 0.0
        %212 = vmatprep.subr.mxu0 0.0
        %213 = vmatpush1.msra.mxu0 0.0
        %214 = vmatprep.subr.mxu0 0.0
        %215 = vmatpush1.msra.mxu0 0.0
        %216 = vmatprep.subr.mxu0 0.0
        %217 = vmatpush1.msra.mxu0 0.0
        %218 = vmatprep.subr.mxu0 0.0
        %219 = vmatpush1.msra.mxu0 0.0
        %220 = vmatprep.subr.mxu0 0.0
        %221 = vmatpush1.msra.mxu0 0.0
        %222 = vmatprep.subr.mxu0 0.0
        %223 = vmatpush1.msra.mxu0 0.0
        %224 = vmatprep.subr.mxu0 0.0
        %225 = vmatpush1.msra.mxu0 0.0
        %226 = vmatprep.subr.mxu0 0.0
        %227 = vmatpush1.msra.mxu0 0.0
        %228 = vmatprep.subr.mxu0 0.0
        %229 = vmatpush1.msra.mxu0 0.0
        %230 = vmatprep.subr.mxu0 0.0
        %231 = vmatpush1.msra.mxu0 0.0
        %232 = vmatprep.subr.mxu0 0.0
        %233 = vmatpush1.msra.mxu0 0.0
        %234 = vmatprep.subr.mxu0 0.0
        %235 = vmatpush1.msra.mxu0 0.0
        %236 = vmatprep.subr.mxu0 0.0
        %237 = vmatpush1.msra.mxu0 0.0
        %238 = vmatprep.subr.mxu0 0.0
        %239 = vmatpush1.msra.mxu0 0.0
        %240 = vmatprep.subr.mxu0 0.0
        %241 = vmatpush1.msra.mxu0 0.0
        %242 = vmatprep.subr.mxu0 0.0
        %243 = vmatpush1.msra.mxu0 0.0
        %244 = vmatprep.subr.mxu0 0.0
        %245 = vmatpush1.msra.mxu0 0.0
        %246 = vmatprep.mubr.f32.mxu0 0.0
        %247 = vmatmul.mubr.f32.gmra.mrb[0].mxu0 %v177
        %v248 = vpop.f32.mrb[0].mxu0
        %v249 = vadd.f32 0.0, %v248
        %v250 = vpop.f32.mrb[0].mxu0
        %251 = vmatprep.mubr.f32.mxu0 0.0
        %252 = vmatmul.mubr.f32.gmra.mrb[0].mxu0 %v180
        %v253 = vpop.f32.mrb[0].mxu0
        %v254 = vadd.f32 0.0, %v253
        %v255 = vpop.f32.mrb[0].mxu0
        %256 = vdwg.mxu0
        %v257 = vxor.u32 %v249, 2147483648
        %v258 = vxor.u32 %v254, 2147483648
        %v259 = vmul.f32 %v257, 1.442695
        %v260 = vpow.pop %v259
        %v261 = vmul.f32 %v258, 1.442695
        %v262 = vpow.pop %v261
        %v263 = vadd.f32 %v260, 1.0
        %v264 = vadd.f32 %v262, 1.0
        %v265 = vrcp.pop %v263
        %v266 = vmul.f32 1.0, %v265
        %v267 = vrcp.pop %v264
        %v268 = vmul.f32 1.0, %v267
        %v269 = vmul.f32 %v249, %v266
        %v270 = vmul.f32 %v254, %v268
        %271 = vst [vmem:[%s159] sm:$0xff] %v269
        %272 = vst [vmem:[%s159 + $0x8] sm:$0x3] %v270
        %s273 = sand.u32 %s87, 1
        %s274 = sand.u32 %s87, 1
        %s275 = smul.addr %s274, 16
        %s276 = scalar_lea.vmem [#allocation2], %s275
        // Predicated region
        $region29: #{conv_transpose2d_silu.1} parent=27 // pred_check
          %p277 = pneg %p97
        $region30: #{conv_transpose2d_silu.1} parent=27 // pred_check_branch
          %279 = sbr.rel (%p277) target = $region32
        $region31: #{conv_transpose2d_silu.1} parent=27 // pred_region
          %s280 = sadd.s32 %s17, %s18
          %s281 = smul.addr %s280, 8
          %s282 = scalar_lea.vmem %s2, %s281
          // Predicated region
          $region33: #{conv_transpose2d_silu.1} parent=31 // pred_check
            _
          $region34: #{conv_transpose2d_silu.1} parent=31 // pred_check_branch
            %284 = sbr.rel (0) target = $region36
          $region35: #{conv_transpose2d_silu.1} parent=31 // pred_region
            // Predicated region
            $region37: #{conv_transpose2d_silu.1} parent=35 // pred_check
              _
            $region38: #{conv_transpose2d_silu.1} parent=35 // pred_check_branch
              %286 = sbr.rel (0) target = $region40
            $region39: #{conv_transpose2d_silu.1} parent=35 // pred_region
              // Predicated region
              $region52: #{conv_transpose2d_silu.1} parent=39 // pred_check
                _
              $region53: #{conv_transpose2d_silu.1} parent=39 // pred_check_branch
                %303 = sbr.rel (0) target = $region55
              $region54: #{conv_transpose2d_silu.1} parent=39 // pred_region
                loop: start=0, step=1, limit=1
                $region56: #{conv_transpose2d_silu.1} parent=54 // loop_pre_header
                  _
                $region57: #{conv_transpose2d_silu.1} parent=54 // loop_header
                  %s305 = sphi 0, %s309
                  %p306 = scmp.ge.s32.totalorder %s305, 1
                  %s310 = sphi %s276, %s276
                  %s311 = sphi %s282, %s282
                $region58: #{conv_transpose2d_silu.1} parent=54 // loop_header_branch
                  %308 = sbr.rel (%p306) target = $region62
                $region59: #{conv_transpose2d_silu.1} parent=54 // loop_body
                  %v312 = vld [vmem:[%s310] sm:$0xff]
                  %313 = vst [vmem:[%s311] sm:$0xff] %v312
                  %v314 = vld [vmem:[%s310 + $0x8] sm:$0xff]
                  %315 = vst [vmem:[%s311 + $0x20] sm:$0xff] %v314
                $region60: #{conv_transpose2d_silu.1} parent=54 // loop_footer
                  %s309 = sadd.s32 1, %s305
                $region61: #{conv_transpose2d_silu.1} parent=54 // loop_footer_branch
                  %304 = sbr.rel target = $region57
                $region62: #{conv_transpose2d_silu.1} parent=54 // loop_exit
                  _
              $region55: #{conv_transpose2d_silu.1} parent=39 // pred_fallthru
                _
              // Predicated region
              $region63: #{conv_transpose2d_silu.1} parent=39 // pred_check
                _
              $region64: #{conv_transpose2d_silu.1} parent=39 // pred_check_branch
                %317 = sbr.rel target = $region66
              $region65: #{conv_transpose2d_silu.1} parent=39 // pred_region
                _
              $region66: #{conv_transpose2d_silu.1} parent=39 // pred_fallthru
                _
            $region40: #{conv_transpose2d_silu.1} parent=35 // pred_fallthru
              _
            // Predicated region
            $region41: #{conv_transpose2d_silu.1} parent=35 // pred_check
              _
            $region42: #{conv_transpose2d_silu.1} parent=35 // pred_check_branch
              %288 = sbr.rel target = $region44
            $region43: #{conv_transpose2d_silu.1} parent=35 // pred_region
              loop: start=0, step=1, limit=1
              $region45: #{conv_transpose2d_silu.1} parent=43 // loop_pre_header
                _
              $region46: #{conv_transpose2d_silu.1} parent=43 // loop_header
                %s291 = sphi 0, %s295
                %p292 = scmp.ge.s32.totalorder %s291, 1
                %s296 = sphi %s276, %s276
                %s297 = sphi %s282, %s282
              $region47: #{conv_transpose2d_silu.1} parent=43 // loop_header_branch
                %294 = sbr.rel (%p292) target = $region51
              $region48: #{conv_transpose2d_silu.1} parent=43 // loop_body
                %v298 = vld [vmem:[%s296] sm:$0xff]
                %299 = vst [vmem:[%s297] sm:$0xff] %v298
                %v300 = vld [vmem:[%s296 + $0x8] sm:$0xff]
                %301 = vst [vmem:[%s297 + $0x20] sm:$0xff] %v300
              $region49: #{conv_transpose2d_silu.1} parent=43 // loop_footer
                %s295 = sadd.s32 1, %s291
              $region50: #{conv_transpose2d_silu.1} parent=43 // loop_footer_branch
                %290 = sbr.rel target = $region46
              $region51: #{conv_transpose2d_silu.1} parent=43 // loop_exit
                _
            $region44: #{conv_transpose2d_silu.1} parent=35 // pred_fallthru
              _
          $region36: #{conv_transpose2d_silu.1} parent=31 // pred_fallthru
            _
          %318 = vnop
        $region32: #{conv_transpose2d_silu.1} parent=27 // pred_fallthru
          _
      $region28: #{conv_transpose2d_silu.1} parent=5 // pred_fallthru
        _
      %p319 = scmp.le.s32.totalorder 2, %s8
      // Predicated region
      $region67: #{conv_transpose2d_silu.1} parent=5 // pred_check
        %p320 = pneg %p319
      $region68: #{conv_transpose2d_silu.1} parent=5 // pred_check_branch
        %322 = sbr.rel (%p320) target = $region70
      $region69: #{conv_transpose2d_silu.1} parent=5 // pred_region
        %s323 = ssub.s32 %s8, 2
        // Predicated region
        $region71: #{conv_transpose2d_silu.1} parent=69 // pred_check
          %p324 = pneg %p103
        $region72: #{conv_transpose2d_silu.1} parent=69 // pred_check_branch
          %326 = sbr.rel (%p324) target = $region74
        $region73: #{conv_transpose2d_silu.1} parent=69 // pred_region
          %s327 = sand.u32 %s88, 1
          %s328 = sand.u32 %s88, 1
          %s329 = smul.addr %s328, 16
          %s330 = scalar_lea.vmem [#allocation2], %s329
        $region74: #{conv_transpose2d_silu.1} parent=69 // pred_fallthru
          _
      $region70: #{conv_transpose2d_silu.1} parent=5 // pred_fallthru
        _
    $region6: #{conv_transpose2d_silu.1} parent=1 // loop_footer
      %s12 = sadd.s32 1, %s8
    $region7: #{conv_transpose2d_silu.1} parent=1 // loop_footer_branch
      %7 = sbr.rel target = $region3
    $region8: #{conv_transpose2d_silu.1} parent=1 // loop_exit
      _

</llo_original>
